<compile_context>
chip_gen: v6e
topology: v6e:2x2x1
jax: 0.10.0
libtpu: 0.0.40
codegen_flags: <defaults>
</compile_context>

<pallas_src>
import jax
import jax.numpy as jnp
from jax.experimental import pallas as pl
from jax.experimental.pallas import tpu as pltpu


def _make_label_smoothing_kernel(vocab, tm, padding_idx, conf, fill):
    # NOTE: vocab/tm/padding_idx are Python ints and conf/fill Python floats, so they are
    # baked in as literals (no captured jax-array constants -> compiles cleanly).
    padding_idx = int(padding_idx)
    conf = float(conf)
    fill = float(fill)

    def kernel(x_ref, t_ref, o_ref):
        tgt = t_ref[...]                                                      # (tm, 1) i32

        # Pass 1 (native dtype): row max. max over bf16 values is exact; upcast scalar.
        m = jnp.max(x_ref[...], axis=-1, keepdims=True).astype(jnp.float32)   # (tm, 1)

        # Pass 2: exp-sum -> logsumexp. Cast to f32 inside the consumer expression.
        lse = jnp.log(jnp.sum(jnp.exp(x_ref[...].astype(jnp.float32) - m),
                              axis=-1, keepdims=True)) + m                    # (tm, 1)

        # Pass 3 (fused): weighted reduction  sum_c w*x  with
        #   w = conf at the target column, fill elsewhere,
        # plus a static one-column correction for the padding column (w there must be 0):
        #   sum_c td*x = sum_c w*x - fill*x[:, pad]        (target != pad on live rows)
        col = jax.lax.broadcasted_iota(jnp.int32, (tm, vocab), 1)
        w = jnp.where(col == tgt, conf, fill)                                 # (tm, V) f32
        xf = x_ref[...].astype(jnp.float32)
        dot = (jnp.sum(w * xf, axis=-1, keepdims=True)
               - fill * xf[:, padding_idx:padding_idx + 1])                   # (tm, 1)

        # Row loss = -sum_c td*logp = lse - sum_c td*x  (sum_c td == 1 on non-pad rows).
        row_loss = lse - dot
        row_loss = jnp.where(tgt == padding_idx, 0.0, row_loss)               # pad rows -> 0

        tile_loss = jnp.sum(row_loss)                       # scalar partial for this tile
        # Lane-dense, sublane-aligned partial-output block; wrapper reads [:, 0, 0].
        o_ref[...] = jnp.broadcast_to(tile_loss, (1, 8, 128)).astype(jnp.float32)

    return kernel


def label_smoothing_loss(x, target, *, padding_idx, smoothing=0.1, tm=None,
                         vmem_budget_bytes=40 * 1024 * 1024):
    """Pallas implementation of LabelSmoothing.forward. Returns a scalar f32 loss."""
    n_rows, vocab = x.shape
    assert vocab > 2, "fill = eps/(V-2) requires V > 2"
    eps = float(smoothing)
    conf = 1.0 - eps
    fill = eps / (vocab - 2)

    itemsize = jnp.dtype(x.dtype).itemsize
    # Per-row VMEM cost: double-buffered input block + ~4 full-width f32/i32 temporaries
    # (exp result, iota, weights, weighted product) inside the kernel.
    per_row = 2 * vocab * itemsize + 4 * vocab * 4
    n_ceil8 = -(-n_rows // 8) * 8

    if tm is None:
        tm = (vmem_budget_bytes // per_row) // 8 * 8
        tm = max(8, min(512, tm))
        tm = min(tm, n_ceil8)
        # Keep >= 2 grid steps when possible so v7x's two TensorCores both get work.
        if n_ceil8 >= 16:
            tm = min(tm, max(8, (n_ceil8 // 2) // 8 * 8))

    # Scale the scoped VMEM limit to the actual need (floor 32 MiB, generous headroom).
    vmem_limit = int(min(100 * 1024 * 1024,
                         max(32 * 1024 * 1024, tm * per_row * 5 // 4 + (1 << 20))))

    # Pad rows to a multiple of tm; padded rows get target == padding_idx => zero loss.
    n_pad = -(-n_rows // tm) * tm
    if n_pad != n_rows:
        x = jnp.pad(x, ((0, n_pad - n_rows), (0, 0)))
        target = jnp.pad(target, (0, n_pad - n_rows), constant_values=padding_idx)
    target2d = target.reshape(n_pad, 1).astype(jnp.int32)

    num_tiles = n_pad // tm
    kernel = _make_label_smoothing_kernel(vocab, tm, padding_idx, conf, fill)

    partials = pl.pallas_call(
        kernel,
        out_shape=jax.ShapeDtypeStruct((num_tiles, 8, 128), jnp.float32),
        grid_spec=pltpu.PrefetchScalarGridSpec(
            num_scalar_prefetch=0,
            grid=(num_tiles,),
            in_specs=[
                pl.BlockSpec((tm, vocab), lambda i: (i, 0)),
                pl.BlockSpec((tm, 1), lambda i: (i, 0)),
            ],
            out_specs=pl.BlockSpec((1, 8, 128), lambda i: (i, 0, 0)),
        ),
        compiler_params=pltpu.CompilerParams(
            # Per-tile partial outputs -> no resident accumulator -> both v7x TCs usable.
            dimension_semantics=("parallel",),
            vmem_limit_bytes=vmem_limit,
        ),
    )(x, target2d)

    # Final reduction + normalization by the ORIGINAL row count in the wrapper
    # (matches nn.CrossEntropyLoss(reduction='mean') over all rows, pad rows contribute 0).
    return jnp.sum(partials[:, 0, 0]) / jnp.float32(n_rows)


def _reference_loss(x, target, *, padding_idx, smoothing=0.1):
    """Pure-JAX reference mirroring the PyTorch module (for correctness check)."""
    n_rows, vocab = x.shape
    conf = 1.0 - smoothing
    fill = smoothing / (vocab - 2)
    col = jnp.arange(vocab)[None, :]
    tgt = target[:, None]
    td = jnp.where(col == tgt, conf, fill)
    td = jnp.where(col == padding_idx, 0.0, td)
    td = jnp.where(tgt == padding_idx, 0.0, td)
    logp = jax.nn.log_softmax(x.astype(jnp.float32), axis=-1)
    return (-jnp.sum(td * logp)) / n_rows


if __name__ == "__main__":
    key = jax.random.PRNGKey(0)
    kx, kt = jax.random.split(key)

    padding_idx = 1
    smoothing = 0.1

    # Case 1: batch=2, seq=8 -> N=16 rows flattened; vocab=256.
    N, V = 16, 256
    x = jax.random.normal(kx, (N, V), dtype=jnp.float32)
    target = jax.random.randint(kt, (N,), 0, V, dtype=jnp.int32)
    target = target.at[3].set(padding_idx).at[10].set(padding_idx)  # exercise row zeroing

    loss = label_smoothing_loss(x, target, padding_idx=padding_idx, smoothing=smoothing)
    loss = jax.block_until_ready(loss)
    ref = _reference_loss(x, target, padding_idx=padding_idx, smoothing=smoothing)
    assert jnp.allclose(loss, ref, rtol=1e-5, atol=1e-5), (loss, ref)

    # Case 2: N not a multiple of the tile (exercises the zero-loss row padding path).
    N2 = 13
    x2 = jax.random.normal(jax.random.fold_in(kx, 1), (N2, V), dtype=jnp.float32)
    target2 = jax.random.randint(jax.random.fold_in(kt, 1), (N2,), 0, V, dtype=jnp.int32)
    target2 = target2.at[5].set(padding_idx)

    loss2 = label_smoothing_loss(x2, target2, padding_idx=padding_idx, smoothing=smoothing)
    loss2 = jax.block_until_ready(loss2)
    ref2 = _reference_loss(x2, target2, padding_idx=padding_idx, smoothing=smoothing)
    assert jnp.allclose(loss2, ref2, rtol=1e-5, atol=1e-5), (loss2, ref2)

    print("KERNEL_OK")
</pallas_src>

<mosaic_0001>
module attributes {stable_mosaic.version = 11 : i64} {
  func.func @kernel(%arg0: i32, %arg1: memref<8x256xf32, #tpu.memory_space<vmem>>, %arg2: memref<8x1xi32, #tpu.memory_space<vmem>>, %arg3: memref<1x8x128xf32, #tpu.memory_space<vmem>>) attributes {dimension_semantics = [#tpu.dimension_semantics<parallel>], iteration_bounds = array<i64: 2>, scalar_prefetch = 0 : i64, scratch_operands = 0 : i64, tpu.core_type = #tpu.core_type<tc>, window_params = [{transform_indices = @transform_0, window_bounds = array<i64: 8, 256>}, {transform_indices = @transform_1, window_bounds = array<i64: 8, 1>}, {transform_indices = @transform_2, window_bounds = array<i64: 1, 8, 128>}]} {
    %c0 = arith.constant 0 : index
    %c0_0 = arith.constant 0 : index
    %0 = vector.load %arg2[%c0, %c0_0] : memref<8x1xi32, #tpu.memory_space<vmem>>, vector<8x1xi32>
    %c0_1 = arith.constant 0 : index
    %c0_2 = arith.constant 0 : index
    %1 = vector.load %arg1[%c0_1, %c0_2] : memref<8x256xf32, #tpu.memory_space<vmem>>, vector<8x256xf32>
    %cst = arith.constant dense<0xFF800000> : vector<8xf32>
    %2 = vector.multi_reduction <maximumf>, %1, %cst [1] : vector<8x256xf32> to vector<8xf32>
    %3 = vector.shape_cast %2 : vector<8xf32> to vector<8x1xf32>
    %c0_3 = arith.constant 0 : index
    %c0_4 = arith.constant 0 : index
    %4 = vector.load %arg1[%c0_3, %c0_4] : memref<8x256xf32, #tpu.memory_space<vmem>>, vector<8x256xf32>
    %5 = vector.broadcast %3 : vector<8x1xf32> to vector<8x256xf32>
    %6 = arith.subf %4, %5 : vector<8x256xf32>
    %7 = math.exp %6 : vector<8x256xf32>
    %cst_5 = arith.constant dense<0.000000e+00> : vector<8xf32>
    %8 = vector.multi_reduction <add>, %7, %cst_5 [1] : vector<8x256xf32> to vector<8xf32>
    %9 = vector.shape_cast %8 : vector<8xf32> to vector<8x1xf32>
    %10 = math.log %9 : vector<8x1xf32>
    %11 = arith.addf %10, %3 : vector<8x1xf32>
    %12 = tpu.iota {dimensions = array<i32: 1>} : vector<8x256xi32>
    %13 = vector.broadcast %0 : vector<8x1xi32> to vector<8x256xi32>
    %14 = arith.cmpi eq, %12, %13 : vector<8x256xi32>
    %cst_6 = arith.constant 0.899999976 : f32
    %cst_7 = arith.constant 3.93700786E-4 : f32
    %15 = vector.broadcast %cst_6 : f32 to vector<8x256xf32>
    %16 = vector.broadcast %cst_7 : f32 to vector<8x256xf32>
    %17 = arith.select %14, %15, %16 : vector<8x256xi1>, vector<8x256xf32>
    %c0_8 = arith.constant 0 : index
    %c0_9 = arith.constant 0 : index
    %18 = vector.load %arg1[%c0_8, %c0_9] : memref<8x256xf32, #tpu.memory_space<vmem>>, vector<8x256xf32>
    %19 = arith.mulf %17, %18 : vector<8x256xf32>
    %cst_10 = arith.constant dense<0.000000e+00> : vector<8xf32>
    %20 = vector.multi_reduction <add>, %19, %cst_10 [1] : vector<8x256xf32> to vector<8xf32>
    %21 = vector.shape_cast %20 : vector<8xf32> to vector<8x1xf32>
    %22 = vector.extract_strided_slice %18 {offsets = [0, 1], sizes = [8, 1], strides = [1, 1]} : vector<8x256xf32> to vector<8x1xf32>
    %cst_11 = arith.constant 3.93700786E-4 : f32
    %23 = vector.broadcast %cst_11 : f32 to vector<8x1xf32>
    %24 = arith.mulf %23, %22 : vector<8x1xf32>
    %25 = arith.subf %21, %24 : vector<8x1xf32>
    %26 = arith.subf %11, %25 : vector<8x1xf32>
    %c1_i32 = arith.constant 1 : i32
    %27 = vector.broadcast %c1_i32 : i32 to vector<8x1xi32>
    %28 = arith.cmpi eq, %0, %27 : vector<8x1xi32>
    %cst_12 = arith.constant 0.000000e+00 : f32
    %29 = vector.broadcast %cst_12 : f32 to vector<8x1xf32>
    %30 = arith.select %28, %29, %26 : vector<8x1xi1>, vector<8x1xf32>
    %31 = vector.shape_cast %30 : vector<8x1xf32> to vector<1x8x1xf32>
    %cst_13 = arith.constant dense<0.000000e+00> : vector<1xf32>
    %32 = vector.multi_reduction <add>, %31, %cst_13 [1, 2] : vector<1x8x1xf32> to vector<1xf32>
    %33 = vector.shape_cast %32 : vector<1xf32> to vector<1x1x1xf32>
    %34 = vector.extract %33[0, 0, 0] : f32 from vector<1x1x1xf32>
    %35 = vector.broadcast %34 : f32 to vector<1x8x128xf32>
    %c0_14 = arith.constant 0 : index
    %c0_15 = arith.constant 0 : index
    %c0_16 = arith.constant 0 : index
    %36 = vector.load %arg3[%c0_14, %c0_15, %c0_16] : memref<1x8x128xf32, #tpu.memory_space<vmem>>, vector<1x8x128xf32>
    tpu.vector_store %arg3[%c0_14, %c0_15, %c0_16], %35 {strides = array<i32>} : memref<1x8x128xf32, #tpu.memory_space<vmem>>, vector<1x8x128xf32>,
    return
  }
  func.func @transform_0(%arg0: i32) -> (i32, i32) {
    %c0_i32 = arith.constant 0 : i32
    %c0_i32_0 = arith.constant 0 : i32
    return %arg0, %c0_i32 : i32, i32
  }
  func.func @transform_1(%arg0: i32) -> (i32, i32) {
    %c0_i32 = arith.constant 0 : i32
    %c0_i32_0 = arith.constant 0 : i32
    return %arg0, %c0_i32 : i32, i32
  }
  func.func @transform_2(%arg0: i32) -> (i32, i32, i32) {
    %c0_i32 = arith.constant 0 : i32
    %c0_i32_0 = arith.constant 0 : i32
    %c0_i32_1 = arith.constant 0 : i32
    return %arg0, %c0_i32, %c0_i32_0 : i32, i32, i32
  }
}

</mosaic_0001>

<llo_original>
// kernel: tpu_custom_call.1
$region0: #{tpu_custom_call.1}
  #allocation0 [shape = 'u32[]', space=smem, size = 0x4, offset = 0x4, fixed_abs, tag = 'smem constant byte address 0x4 - core index']
  #allocation1 [shape = 'u32[144,128]{1,0:T(1,128)}', space=vmem, size = 0x12000, scoped, tag = 'internal scratch']
  %s0 = inlined_call_operand.hbm [shape: f32[16,256], index: 0, kind: input, shape index: {}]
  %s1 = inlined_call_operand.vmem [shape: s32[16,1], index: 1, kind: input, shape index: {}]
  %s2 = inlined_call_operand.hbm [shape: f32[2,8,128], index: 2, kind: output, shape index: {}]
  %s3 = sld [smem:[#allocation0]]
  $region45: #{tpu_custom_call.1} parent=0
    _
  %s5 = ssub.s32 1, %s3
  %s6 = scalar_select 0, %s5, %s3
  $region1: #{tpu_custom_call.1} parent=0
    #allocation2 [shape = 'u8[16384]{0}', space=vmem, size = 0x4000, scoped, tag = 'input window, operand 0']
    #allocation3 [shape = 's32[2]{0}', space=sflag, size = 0x8, scoped, tag = 'scoped memory for tpu_custom_call.1']
    #allocation4 [shape = 's32[2]{0}', space=sflag, size = 0x8, scoped, tag = 'scoped memory for tpu_custom_call.1']
    #allocation5 [shape = 'u8[8192]{0}', space=vmem, size = 0x2000, scoped, tag = 'output window, operand 0']
    %7 = vsyncpa [#allocation3], 0
    %s8 = scalar_lea.sflag [#allocation3], 1
    %9 = vsyncpa %s8, 0
    %10 = vsyncpa [#allocation4], 0
    %s11 = scalar_lea.sflag [#allocation4], 1
    %12 = vsyncpa %s11, 0
    loop: start=0, step=1, limit=4
    $region2: #{tpu_custom_call.1} parent=1 // loop_pre_header
      _
    $region3: #{tpu_custom_call.1} parent=1 // loop_header
      %s14 = sphi 0, %s18
      %p15 = scmp.ge.s32.totalorder %s14, 4
      %s24 = sphi 0, %s26
      %s27 = sphi 0, %s24
      %s28 = sphi 0, %s27
      %s44 = sphi 0, %s28
      %s50 = sphi 0, %s52
      %s53 = sphi 0, %s50
      %s54 = sphi 0, %s53
      %s70 = sphi 0, %s54
      %s76 = sphi 0, %s78
      %s79 = sphi 0, %s76
      %s80 = sphi 0, %s79
      %s96 = sphi 0, %s80
    $region4: #{tpu_custom_call.1} parent=1 // loop_header_branch
      %17 = sbr.rel (%p15) target = $region8
    $region5: #{tpu_custom_call.1} parent=1 // loop_body
      %s19 = ssub.s32 %s14, 1
      %s20 = ssub.s32 %s14, 2
      %s21 = sadd.s32 %s14, 1
      %s22 = ssub.s32 %s14, %s21
      %p23 = scmp.eq.s32.totalorder %s22, 0
      %s25 = sadd.s32 %s24, 1
      %s26 = scalar_select %p23, %s24, %s25
      %p29 = pneg %p23
      %p30 = scmp.eq.s32.totalorder %s14, 1
      %p31 = por %p29, %p30
      %p32 = scmp.ne.s32.totalorder %s24, %s27
      %p33 = scmp.eq.s32.totalorder %s14, 0
      %p34 = por %p32, %p33
      %p35 = scmp.ne.s32.totalorder %s24, %s27
      %p36 = scmp.eq.s32.totalorder %s19, 1
      %p37 = por %p35, %p36
      %p38 = scmp.ne.s32.totalorder %s27, %s28
      %p39 = scmp.eq.s32.totalorder %s19, 0
      %p40 = por %p38, %p39
      %p41 = scmp.ne.s32.totalorder %s27, %s28
      %p42 = scmp.eq.s32.totalorder %s20, 1
      %p43 = por %p41, %p42
      %p45 = scmp.ne.s32.totalorder %s28, %s44
      %p46 = scmp.eq.s32.totalorder %s20, 0
      %p47 = por %p45, %p46
      %s48 = ssub.s32 %s14, %s21
      %p49 = scmp.eq.s32.totalorder %s48, 0
      %s51 = sadd.s32 %s50, 1
      %s52 = scalar_select %p49, %s50, %s51
      %p55 = pneg %p49
      %p56 = scmp.eq.s32.totalorder %s14, 1
      %p57 = por %p55, %p56
      %p58 = scmp.ne.s32.totalorder %s50, %s53
      %p59 = scmp.eq.s32.totalorder %s14, 0
      %p60 = por %p58, %p59
      %p61 = scmp.ne.s32.totalorder %s50, %s53
      %p62 = scmp.eq.s32.totalorder %s19, 1
      %p63 = por %p61, %p62
      %p64 = scmp.ne.s32.totalorder %s53, %s54
      %p65 = scmp.eq.s32.totalorder %s19, 0
      %p66 = por %p64, %p65
      %p67 = scmp.ne.s32.totalorder %s53, %s54
      %p68 = scmp.eq.s32.totalorder %s20, 1
      %p69 = por %p67, %p68
      %p71 = scmp.ne.s32.totalorder %s54, %s70
      %p72 = scmp.eq.s32.totalorder %s20, 0
      %p73 = por %p71, %p72
      %s74 = ssub.s32 %s14, %s21
      %p75 = scmp.eq.s32.totalorder %s74, 0
      %s77 = sadd.s32 %s76, 1
      %s78 = scalar_select %p75, %s76, %s77
      %p81 = pneg %p75
      %p82 = scmp.eq.s32.totalorder %s14, 1
      %p83 = por %p81, %p82
      %p84 = scmp.ne.s32.totalorder %s76, %s79
      %p85 = scmp.eq.s32.totalorder %s14, 0
      %p86 = por %p84, %p85
      %p87 = scmp.ne.s32.totalorder %s76, %s79
      %p88 = scmp.eq.s32.totalorder %s19, 1
      %p89 = por %p87, %p88
      %p90 = scmp.ne.s32.totalorder %s79, %s80
      %p91 = scmp.eq.s32.totalorder %s19, 0
      %p92 = por %p90, %p91
      %p93 = scmp.ne.s32.totalorder %s79, %s80
      %p94 = scmp.eq.s32.totalorder %s20, 1
      %p95 = por %p93, %p94
      %p97 = scmp.ne.s32.totalorder %s80, %s96
      %p98 = scmp.eq.s32.totalorder %s20, 0
      %p99 = por %p97, %p98
      %p100 = scmp.le.s32.totalorder 1, %s14
      %p101 = scmp.lt.s32.totalorder %s14, 3
      %p102 = pnand %p100, %p101
      %p103 = pneg %p102
      // Predicated region
      $region9: #{tpu_custom_call.1} parent=5 // pred_check
        _
      $region10: #{tpu_custom_call.1} parent=5 // pred_check_branch
        %105 = sbr.rel (%p102) target = $region12
      $region11: #{tpu_custom_call.1} parent=5 // pred_region
        %s106 = ssub.s32 %s14, 1
      $region12: #{tpu_custom_call.1} parent=5 // pred_fallthru
        _
      %p107 = scmp.lt.s32.totalorder %s14, 2
      // Predicated region
      $region13: #{tpu_custom_call.1} parent=5 // pred_check
        %p108 = pneg %p107
      $region14: #{tpu_custom_call.1} parent=5 // pred_check_branch
        %110 = sbr.rel (%p108) target = $region16
      $region15: #{tpu_custom_call.1} parent=5 // pred_region
        // Predicated region
        $region17: #{tpu_custom_call.1} parent=15 // pred_check
          %p111 = pneg %p34
        $region18: #{tpu_custom_call.1} parent=15 // pred_check_branch
          %113 = sbr.rel (%p111) target = $region20
        $region19: #{tpu_custom_call.1} parent=15 // pred_region
          %s114 = sand.u32 %s24, 1
          %s115 = scalar_lea.sflag [#allocation3], %s114
          %s116 = sand.u32 %s24, 1
          %s117 = smul.addr %s116, 16
          %s118 = scalar_lea.vmem [#allocation2], %s117
          %s120 = ssub.s32 256, 256
          %121 = vsyncadd %s115, %s120
          %s122 = smul.addr %s14, 2
          %s123 = smul.addr %s122, 128
          %s124 = scalar_lea.hbm %s0, %s123
          %s126 = sshll.u32 %s118, 4
          %s127 = int_to_ptr.vmem [resolvable:$true] %s126
          %129 = dma.hbm_to_vmem [thread:$0]  %s124, 256, %s127, %s115
        $region20: #{tpu_custom_call.1} parent=15 // pred_fallthru
          _
        // Predicated region
        $region21: #{tpu_custom_call.1} parent=15 // pred_check
          %p130 = pneg %p60
        $region22: #{tpu_custom_call.1} parent=15 // pred_check_branch
          %132 = sbr.rel (%p130) target = $region24
        $region23: #{tpu_custom_call.1} parent=15 // pred_region
          %p133 = scmp.lt.s32.totalorder %s14, 1
          %s134 = scalar_select %p133, %s14, 1
          %s135 = smul.addr %s134, 8
          %s136 = scalar_lea.vmem %s1, %s135
        $region24: #{tpu_custom_call.1} parent=15 // pred_fallthru
          _
      $region16: #{tpu_custom_call.1} parent=5 // pred_fallthru
        _
      %p137 = scmp.le.s32.totalorder 1, %s14
      %p138 = scmp.lt.s32.totalorder %s14, 3
      %p139 = pnand %p137, %p138
      %p140 = pneg %p139
      // Predicated region
      $region25: #{tpu_custom_call.1} parent=5 // pred_check
        _
      $region26: #{tpu_custom_call.1} parent=5 // pred_check_branch
        %142 = sbr.rel (%p139) target = $region28
      $region27: #{tpu_custom_call.1} parent=5 // pred_region
        %s143 = ssub.s32 %s14, 1
        %s144 = sand.u32 %s27, 1
        %s145 = scalar_lea.sflag [#allocation3], %s144
        %s146 = sand.u32 %s27, 1
        %s147 = smul.addr %s146, 16
        %s148 = scalar_lea.vmem [#allocation2], %s147
        // Predicated region
        $region29: #{tpu_custom_call.1} parent=27 // pred_check
          %p149 = pneg %p40
        $region30: #{tpu_custom_call.1} parent=27 // pred_check_branch
          %151 = sbr.rel (%p149) target = $region32
        $region31: #{tpu_custom_call.1} parent=27 // pred_region
          %152 = dma.done %s145, 256
        $region32: #{tpu_custom_call.1} parent=27 // pred_fallthru
          _
        %s153 = sand.u32 %s27, 1
        %s154 = scalar_lea.sflag [#allocation3], %s153
        %s155 = sand.u32 %s27, 1
        %s156 = smul.addr %s155, 16
        %s157 = scalar_lea.vmem [#allocation2], %s156
        %p158 = pneg %p40
        %p159 = pneg %p37
        %p160 = scmp.lt.s32.totalorder %s19, 1
        %s161 = scalar_select %p160, %s19, 1
        %s162 = smul.addr %s161, 8
        %s163 = scalar_lea.vmem %s1, %s162
        %p164 = pneg %p66
        %p165 = pneg %p63
        %p166 = pneg %p92
        %p167 = pneg %p89
        %s168 = sand.u32 %s79, 1
        %s169 = scalar_lea.sflag [#allocation4], %s168
        %s170 = sand.u32 %s79, 1
        %s171 = smul.addr %s170, 8
        %s172 = scalar_lea.vmem [#allocation5], %s171
        %p173 = scmp.lt.s32.totalorder %s19, 1
        %s174 = scalar_select %p173, %s19, 1
        %s175 = smul.addr %s174, 8
        %s176 = scalar_lea.vmem %s1, %s175
        %v177 = vld [vmem:[%s176] sm:$0xff]
        %v178 = vld [vmem:[%s148] sm:$0xff]
        %v179 = vld [vmem:[%s148 + $0x8] sm:$0xff]
        %v180 = vmax.f32 %v178, %v179
        %181 = vmax.xlane.f32.xlu0 %v180
        %v182 = vpop.xlane.xlu0 %181
        %v183 = vsub.f32 %v178, %v182
        %v184 = vsub.f32 %v179, %v182
        %v185 = vmul.f32 %v183, 1.442695
        %v186 = vpow.pop %v185
        %v187 = vmul.f32 %v184, 1.442695
        %v188 = vpow.pop %v187
        %v189 = vadd.f32 %v186, %v188
        %190 = vadd.xlane.f32.xlu0 %v189
        %v191 = vpop.xlane.xlu0 %190
        %v192 = vlog2.pop %v191
        %v193 = vmul.f32 %v192, 0.6931472
        %v194 = vadd.f32 %v193, %v182
        %v195 = vlaneseq
        %v196 = vand.u32 %v195, 127
        %v197 = vadd.s32 %v196, 128
        %198 = vset.pattern.permute.xlu0 0
        %199 = vperm.xlu0 %198, %v177
        %v200 = vpop.permute.xlu0 %199
        %vm201 = vcmp.eq.s32.totalorder %v196, %v200
        %vm202 = vcmp.eq.s32.totalorder %v197, %v200
        %v203 = vsel %vm201, 0.9, 0.0003937008
        %v204 = vsel %vm202, 0.9, 0.0003937008
        %v205 = vmul.f32 %v203, %v178
        %v206 = vmul.f32 %v204, %v179
        %v207 = vadd.f32 %v205, %v206
        %208 = vadd.xlane.f32.xlu0 %v207
        %v209 = vpop.xlane.xlu0 %208
        %v210 = vmul.f32 %v178, 0.0003937008
        %v211 = vsub.f32 %v209, %v210
        %v212 = vsub.f32 %v194, %v211
        %vm213 = vcmp.eq.s32.totalorder %v177, 1
        %215 = vrot.lane.b32.xlu0 %v212, 127
        %v216 = vpop.permute.xlu0 %215
        %v218 = vsel %vm213, 0.0, %v216
        %vm219 = vcmask 7168
        %v220 = vsel %vm219, %v218, 0.0
        %221 = vadd.xlane.f32.xlu0 %v220
        %v222 = vpop.xlane.xlu0 %221
        %v223 = vrot.slane %v222, 4
        %v224 = vadd.f32 %v222, %v223
        %v225 = vrot.slane %v224, 2
        %v226 = vadd.f32 %v224, %v225
        %v227 = vrot.slane %v226, 1
        %v228 = vadd.f32 %v226, %v227
        %s229 = vtos %v228
        %v230 = vstv %s229
        %231 = vst [vmem:[%s172] sm:$0xff] %v230
        %s232 = sand.u32 %s79, 1
        %s233 = scalar_lea.sflag [#allocation4], %s232
        %s234 = sand.u32 %s79, 1
        %s235 = smul.addr %s234, 8
        %s236 = scalar_lea.vmem [#allocation5], %s235
        // Predicated region
        $region33: #{tpu_custom_call.1} parent=27 // pred_check
          %p237 = pneg %p89
        $region34: #{tpu_custom_call.1} parent=27 // pred_check_branch
          %239 = sbr.rel (%p237) target = $region36
        $region35: #{tpu_custom_call.1} parent=27 // pred_region
          %s241 = ssub.s32 128, 128
          %242 = vsyncadd %s233, %s241
          %s243 = smul.addr %s19, 128
          %s244 = scalar_lea.hbm %s2, %s243
          %s246 = sshll.u32 %s236, 4
          %s247 = int_to_ptr.vmem [resolvable:$true] %s246
          %249 = dma.vmem_to_hbm [thread:$0]  %s247, 128, %s244, %s233
        $region36: #{tpu_custom_call.1} parent=27 // pred_fallthru
          _
      $region28: #{tpu_custom_call.1} parent=5 // pred_fallthru
        _
      %p250 = scmp.le.s32.totalorder 2, %s14
      // Predicated region
      $region37: #{tpu_custom_call.1} parent=5 // pred_check
        %p251 = pneg %p250
      $region38: #{tpu_custom_call.1} parent=5 // pred_check_branch
        %253 = sbr.rel (%p251) target = $region40
      $region39: #{tpu_custom_call.1} parent=5 // pred_region
        %s254 = ssub.s32 %s14, 2
        // Predicated region
        $region41: #{tpu_custom_call.1} parent=39 // pred_check
          %p255 = pneg %p95
        $region42: #{tpu_custom_call.1} parent=39 // pred_check_branch
          %257 = sbr.rel (%p255) target = $region44
        $region43: #{tpu_custom_call.1} parent=39 // pred_region
          %s258 = sand.u32 %s80, 1
          %s259 = scalar_lea.sflag [#allocation4], %s258
          %s260 = sand.u32 %s80, 1
          %s261 = smul.addr %s260, 8
          %s262 = scalar_lea.vmem [#allocation5], %s261
          %263 = dma.done %s259, 128
        $region44: #{tpu_custom_call.1} parent=39 // pred_fallthru
          _
      $region40: #{tpu_custom_call.1} parent=5 // pred_fallthru
        _
    $region6: #{tpu_custom_call.1} parent=1 // loop_footer
      %s18 = sadd.s32 1, %s14
    $region7: #{tpu_custom_call.1} parent=1 // loop_footer_branch
      %13 = sbr.rel target = $region3
    $region8: #{tpu_custom_call.1} parent=1 // loop_exit
      _
    %264 = vsyncpa [#allocation3], 1
    %s265 = scalar_lea.sflag [#allocation3], 1
    %266 = vsyncpa %s265, 1
    %267 = vsyncpa [#allocation4], 1
    %s268 = scalar_lea.sflag [#allocation4], 1
    %269 = vsyncpa %s268, 1

</llo_original>
